<compile_context>
chip_gen: v7x
topology: tpu7x:2x2x1
jax: 0.10.0
libtpu: 0.0.40
codegen_flags: <defaults>
</compile_context>

<pallas_src>
import jax
import jax.numpy as jnp
from jax.experimental import pallas as pl
from jax.experimental.pallas import tpu as pltpu


def _cross_se_1d_kernel(x_ref, w1_ref, w2_ref, y_ref, o_ref, scale_ref):
    """One grid step = (batch b, length-tile l).

    x_ref:     (1, C, Lx)  squeeze input for batch b (resident across L tiles)
    w1_ref:    (H, C)      Linear(C->H).weight, PyTorch orientation (resident)
    w2_ref:    (C, H)      Linear(H->C).weight, PyTorch orientation (resident)
    y_ref:     (1, C, Lt)  streamed tile of the gated tensor
    o_ref:     (1, C, Lt)  streamed output tile
    scale_ref: (C, 1)      per-batch SE scale, persists across L tiles
    """
    # Compute the per-batch scale only on the first L tile of each batch.
    @pl.when(pl.program_id(1) == 0)
    def _():
        xb = x_ref[0].astype(jnp.float32)                       # (C, Lx)
        pooled = jnp.mean(xb, axis=-1, keepdims=True)           # (C, 1)  AdaptiveAvgPool1d(1)
        h = jnp.dot(w1_ref[...].astype(jnp.float32), pooled,
                    preferred_element_type=jnp.float32)          # (H, 1)
        h = jnp.maximum(h, 0.0)                                  # ReLU
        s = jnp.dot(w2_ref[...].astype(jnp.float32), h,
                    preferred_element_type=jnp.float32)          # (C, 1)
        scale_ref[...] = jax.nn.sigmoid(s).astype(scale_ref.dtype)

    # Streaming gating multiply: (C, Lt) * (C, 1) broadcasts along lanes.
    o_ref[0] = (y_ref[0] * scale_ref[...]).astype(o_ref.dtype)


def _pick_l_tile(L, max_tile=1024):
    """Largest multiple of 128 that divides L and is <= max_tile; else full L."""
    if L % 128 != 0:
        return L  # full-extent block is always legal (bypasses lane constraint)
    t = min(L, max_tile)
    t -= t % 128
    while L % t != 0:
        t -= 128
    return t


def cross_se_1d(x, y, w1, w2, *, l_tile=None):
    """CrossSE_1d forward.

    x:  (B, C, Lx) squeeze branch (mean-pooled over Lx)
    y:  (B, C, Ly) tensor being gated
    w1: (H, C)  = nn.Linear(C, H, bias=False).weight (PyTorch layout)
    w2: (C, H)  = nn.Linear(H, C, bias=False).weight (PyTorch layout)
    """
    B, C, Lx = x.shape
    By, Cy, Ly = y.shape
    assert (By, Cy) == (B, C)
    H, Cw = w1.shape
    assert Cw == C and w2.shape == (C, H)

    if l_tile is None:
        l_tile = _pick_l_tile(Ly)
    assert Ly % l_tile == 0
    assert l_tile == Ly or l_tile % 128 == 0, "L tile must be lane-dense or full extent"
    n_l = Ly // l_tile

    # TODO(synk): if Lx ever becomes too large for one VMEM slab, tile the mean
    # over an extra "arbitrary" grid axis with a running-sum scratch.

    return pl.pallas_call(
        _cross_se_1d_kernel,
        out_shape=jax.ShapeDtypeStruct((B, C, Ly), y.dtype),
        grid_spec=pltpu.PrefetchScalarGridSpec(
            num_scalar_prefetch=0,
            grid=(B, n_l),
            in_specs=[
                # x: per-batch slab; block index changes only with b -> DMA'd once per batch.
                pl.BlockSpec((1, C, Lx), lambda b, l: (b, 0, 0)),
                # Tiny weights: constant block index -> VMEM-resident for the whole grid.
                pl.BlockSpec((H, C), lambda b, l: (0, 0)),
                pl.BlockSpec((C, H), lambda b, l: (0, 0)),
                # y: streamed, lane-dense, double-buffered by the Pallas pipeline.
                pl.BlockSpec((1, C, l_tile), lambda b, l: (b, 0, l)),
            ],
            out_specs=pl.BlockSpec((1, C, l_tile), lambda b, l: (b, 0, l)),
            scratch_shapes=[pltpu.VMEM((C, 1), y.dtype)],
        ),
        compiler_params=pltpu.CompilerParams(
            # Batch axis is fully independent -> megacore-splittable on v7x.
            # L-tile axis carries the persistent scale scratch -> arbitrary.
            dimension_semantics=("parallel", "arbitrary"),
            # Above v5e's 16 MiB scoped default, far below every chip's physical VMEM.
            vmem_limit_bytes=32 * 1024 * 1024,
        ),
    )(x, w1, w2, y)


def cross_se_1d_reference(x, y, w1, w2):
    pooled = jnp.mean(x, axis=-1)                # (B, C)
    h = jnp.maximum(pooled @ w1.T, 0.0)          # (B, H)
    s = jax.nn.sigmoid(h @ w2.T)                 # (B, C)
    return y * s[:, :, None]


if __name__ == "__main__":
    # Small shapes consistent with the module: channel=32, reduction=4 -> hidden=8.
    B, C = 2, 32
    reduction = 4
    H = C // reduction
    Lx, Ly = 256, 512   # x (pooled) and y (gated) lengths may differ

    key = jax.random.PRNGKey(0)
    kx, ky, kw1, kw2 = jax.random.split(key, 4)

    x = jax.random.normal(kx, (B, C, Lx), dtype=jnp.float32)
    y = jax.random.normal(ky, (B, C, Ly), dtype=jnp.float32)
    # PyTorch Linear weight shapes: (out_features, in_features).
    w1 = jax.random.normal(kw1, (H, C), dtype=jnp.float32) * 0.1  # Linear(C -> H).weight
    w2 = jax.random.normal(kw2, (C, H), dtype=jnp.float32) * 0.1  # Linear(H -> C).weight

    # l_tile=128 -> 4 lane-dense L tiles per batch, 8 pipelined grid steps total.
    out = cross_se_1d(x, y, w1, w2, l_tile=128)
    out = jax.block_until_ready(out)

    ref = cross_se_1d_reference(x, y, w1, w2)
    assert out.shape == (B, C, Ly)
    assert jnp.allclose(out, ref, atol=2e-5, rtol=2e-5), "mismatch vs reference"

    print("KERNEL_OK")
</pallas_src>

<mosaic_0001>
module attributes {stable_mosaic.version = 11 : i64} {
  func.func @_cross_se_1d_kernel(%arg0: i32, %arg1: i32, %arg2: memref<1x32x256xf32, #tpu.memory_space<vmem>>, %arg3: memref<8x32xf32, #tpu.memory_space<vmem>>, %arg4: memref<32x8xf32, #tpu.memory_space<vmem>>, %arg5: memref<1x32x128xf32, #tpu.memory_space<vmem>>, %arg6: memref<1x32x128xf32, #tpu.memory_space<vmem>>, %arg7: memref<32x1xf32, #tpu.memory_space<vmem>>) attributes {dimension_semantics = [#tpu.dimension_semantics<parallel>, #tpu.dimension_semantics<arbitrary>], iteration_bounds = array<i64: 2, 4>, scalar_prefetch = 0 : i64, scratch_operands = 1 : i64, tpu.core_type = #tpu.core_type<tc>, window_params = [{transform_indices = @transform_0, window_bounds = array<i64: 1, 32, 256>}, {pipeline_mode = #tpu.pipeline_mode<synchronous>, transform_indices = @transform_1, window_bounds = array<i64: 8, 32>}, {pipeline_mode = #tpu.pipeline_mode<synchronous>, transform_indices = @transform_2, window_bounds = array<i64: 32, 8>}, {transform_indices = @transform_3, window_bounds = array<i64: 1, 32, 128>}, {transform_indices = @transform_4, window_bounds = array<i64: 1, 32, 128>}]} {
    %c0_i32 = arith.constant 0 : i32
    %0 = arith.cmpi eq, %arg1, %c0_i32 : i32
    %1 = arith.extui %0 : i1 to i32
    %c0_i32_0 = arith.constant 0 : i32
    %2 = arith.cmpi ne, %1, %c0_i32_0 : i32
    scf.if %2 {
      %c0_8 = arith.constant 0 : index
      %c0_9 = arith.constant 0 : index
      %c0_10 = arith.constant 0 : index
      %11 = vector.load %arg2[%c0_8, %c0_9, %c0_10] : memref<1x32x256xf32, #tpu.memory_space<vmem>>, vector<1x32x256xf32>
      %12 = vector.shape_cast %11 : vector<1x32x256xf32> to vector<32x256xf32>
      %cst = arith.constant dense<0.000000e+00> : vector<32xf32>
      %13 = vector.multi_reduction <add>, %12, %cst [1] : vector<32x256xf32> to vector<32xf32>
      %14 = vector.shape_cast %13 : vector<32xf32> to vector<32x1xf32>
      %cst_11 = arith.constant 2.560000e+02 : f32
      %15 = vector.broadcast %cst_11 : f32 to vector<32x1xf32>
      %16 = arith.divf %14, %15 : vector<32x1xf32>
      %c0_12 = arith.constant 0 : index
      %c0_13 = arith.constant 0 : index
      %17 = vector.load %arg3[%c0_12, %c0_13] : memref<8x32xf32, #tpu.memory_space<vmem>>, vector<8x32xf32>
      %cst_14 = arith.constant dense<0.000000e+00> : vector<8x1xf32>
      %18 = tpu.matmul %17, %16, %cst_14 {dimension_numbers = #tpu.dot_dimension_numbers<[1], [0], [0], [1], [0, 0, 1, 1], [], []>} : vector<8x32xf32>, vector<32x1xf32>, vector<8x1xf32> -> vector<8x1xf32>
      %cst_15 = arith.constant 0.000000e+00 : f32
      %19 = vector.broadcast %cst_15 : f32 to vector<8x1xf32>
      %20 = arith.maximumf %18, %19 : vector<8x1xf32>
      %c0_16 = arith.constant 0 : index
      %c0_17 = arith.constant 0 : index
      %21 = vector.load %arg4[%c0_16, %c0_17] : memref<32x8xf32, #tpu.memory_space<vmem>>, vector<32x8xf32>
      %cst_18 = arith.constant dense<0.000000e+00> : vector<32x1xf32>
      %22 = tpu.matmul %21, %20, %cst_18 {dimension_numbers = #tpu.dot_dimension_numbers<[1], [0], [0], [1], [0, 0, 1, 1], [], []>} : vector<32x8xf32>, vector<8x1xf32>, vector<32x1xf32> -> vector<32x1xf32>
      %23 = arith.negf %22 : vector<32x1xf32>
      %24 = math.exp %23 : vector<32x1xf32>
      %cst_19 = arith.constant 1.000000e+00 : f32
      %25 = vector.broadcast %cst_19 : f32 to vector<32x1xf32>
      %26 = arith.addf %25, %24 : vector<32x1xf32>
      %27 = arith.divf %25, %26 : vector<32x1xf32>
      %c0_20 = arith.constant 0 : index
      %c0_21 = arith.constant 0 : index
      %28 = vector.load %arg7[%c0_20, %c0_21] : memref<32x1xf32, #tpu.memory_space<vmem>>, vector<32x1xf32>
      tpu.vector_store %arg7[%c0_20, %c0_21], %27 {strides = array<i32>} : memref<32x1xf32, #tpu.memory_space<vmem>>, vector<32x1xf32>,
    } else {
    }
    %c0 = arith.constant 0 : index
    %c0_1 = arith.constant 0 : index
    %c0_2 = arith.constant 0 : index
    %3 = vector.load %arg5[%c0, %c0_1, %c0_2] : memref<1x32x128xf32, #tpu.memory_space<vmem>>, vector<1x32x128xf32>
    %4 = vector.shape_cast %3 : vector<1x32x128xf32> to vector<32x128xf32>
    %c0_3 = arith.constant 0 : index
    %c0_4 = arith.constant 0 : index
    %5 = vector.load %arg7[%c0_3, %c0_4] : memref<32x1xf32, #tpu.memory_space<vmem>>, vector<32x1xf32>
    %6 = vector.broadcast %5 : vector<32x1xf32> to vector<32x128xf32>
    %7 = arith.mulf %4, %6 : vector<32x128xf32>
    %c0_5 = arith.constant 0 : index
    %c0_6 = arith.constant 0 : index
    %c0_7 = arith.constant 0 : index
    %8 = vector.load %arg6[%c0_5, %c0_6, %c0_7] : memref<1x32x128xf32, #tpu.memory_space<vmem>>, vector<1x32x128xf32>
    %9 = vector.shape_cast %8 : vector<1x32x128xf32> to vector<32x128xf32>
    %10 = vector.shape_cast %7 : vector<32x128xf32> to vector<1x32x128xf32>
    tpu.vector_store %arg6[%c0_5, %c0_6, %c0_7], %10 {strides = array<i32>} : memref<1x32x128xf32, #tpu.memory_space<vmem>>, vector<1x32x128xf32>,
    return
  }
  func.func @transform_0(%arg0: i32, %arg1: i32) -> (i32, i32, i32) {
    %c0_i32 = arith.constant 0 : i32
    %c0_i32_0 = arith.constant 0 : i32
    %c0_i32_1 = arith.constant 0 : i32
    return %arg0, %c0_i32, %c0_i32_0 : i32, i32, i32
  }
  func.func @transform_1(%arg0: i32, %arg1: i32) -> (i32, i32) {
    %c0_i32 = arith.constant 0 : i32
    %c0_i32_0 = arith.constant 0 : i32
    %c0_i32_1 = arith.constant 0 : i32
    return %c0_i32, %c0_i32_0 : i32, i32
  }
  func.func @transform_2(%arg0: i32, %arg1: i32) -> (i32, i32) {
    %c0_i32 = arith.constant 0 : i32
    %c0_i32_0 = arith.constant 0 : i32
    %c0_i32_1 = arith.constant 0 : i32
    return %c0_i32, %c0_i32_0 : i32, i32
  }
  func.func @transform_3(%arg0: i32, %arg1: i32) -> (i32, i32, i32) {
    %c0_i32 = arith.constant 0 : i32
    %c0_i32_0 = arith.constant 0 : i32
    return %arg0, %c0_i32, %arg1 : i32, i32, i32
  }
  func.func @transform_4(%arg0: i32, %arg1: i32) -> (i32, i32, i32) {
    %c0_i32 = arith.constant 0 : i32
    %c0_i32_0 = arith.constant 0 : i32
    return %arg0, %c0_i32, %arg1 : i32, i32, i32
  }
}

</mosaic_0001>

<llo_original>
// kernel: tpu_custom_call.1
$region0: #{tpu_custom_call.1}
  #allocation0 [shape = 'u32[]', space=smem, size = 0x4, offset = 0x4, fixed_abs, tag = 'smem constant byte address 0x4 - core index']
  #allocation1 [shape = 'u32[144,128]{1,0:T(1,128)}', space=vmem, size = 0x12000, scoped, tag = 'internal scratch']
  #allocation2 [shape = 'f32[32,1]{1,0:T(8,128)}', space=vmem, size = 0x4000, scoped, tag = 'scratch operand']
  %s0 = inlined_call_operand.hbm [shape: f32[2,32,256], index: 0, kind: input, shape index: {}]
  %s1 = inlined_call_operand.vmem [shape: f32[8,32], index: 1, kind: input, shape index: {}]
  %s2 = inlined_call_operand.vmem [shape: f32[32,8], index: 2, kind: input, shape index: {}]
  %s3 = inlined_call_operand.hbm [shape: f32[2,32,512], index: 3, kind: input, shape index: {}]
  %s4 = inlined_call_operand.hbm [shape: f32[2,32,512], index: 4, kind: output, shape index: {}]
  %s5 = sld [smem:[#allocation0]]
  $region61: #{tpu_custom_call.1} parent=0
    _
  %s7 = ssub.s32 1, %s5
  %s8 = scalar_select 0, %s7, %s5
  $region1: #{tpu_custom_call.1} parent=0
    #allocation3 [shape = 'u8[65536]{0}', space=vmem, size = 0x10000, scoped, tag = 'input window, operand 0']
    #allocation4 [shape = 's32[2]{0}', space=sflag, size = 0x8, scoped, tag = 'scoped memory for tpu_custom_call.1']
    #allocation5 [shape = 's32[2]{0}', space=sflag, size = 0x8, scoped, tag = 'scoped memory for tpu_custom_call.1']
    #allocation6 [shape = 'u8[32768]{0}', space=vmem, size = 0x8000, scoped, tag = 'input window, operand 3']
    #allocation7 [shape = 's32[2]{0}', space=sflag, size = 0x8, scoped, tag = 'scoped memory for tpu_custom_call.1']
    #allocation8 [shape = 'u8[32768]{0}', space=vmem, size = 0x8000, scoped, tag = 'output window, operand 0']
    %9 = vsyncpa [#allocation4], 0
    %s10 = scalar_lea.sflag [#allocation4], 1
    %11 = vsyncpa %s10, 0
    %12 = vsyncpa [#allocation7], 0
    %s13 = scalar_lea.sflag [#allocation7], 1
    %14 = vsyncpa %s13, 0
    %15 = vsyncpa [#allocation5], 0
    %s16 = scalar_lea.sflag [#allocation5], 1
    %17 = vsyncpa %s16, 0
    loop: start=0, step=1, limit=10
    $region2: #{tpu_custom_call.1} parent=1 // loop_pre_header
      _
    $region3: #{tpu_custom_call.1} parent=1 // loop_header
      %s19 = sphi 0, %s23
      %p20 = scmp.ge.s32.totalorder %s19, 10
      %s26 = sphi 0, %s38
      %s27 = sphi 0, %s34
      %s28 = sphi 0, %s26
      %s29 = sphi 0, %s27
      %s30 = sphi 0, %s28
      %s31 = sphi 0, %s29
      %s41 = sphi 0, %s43
      %s44 = sphi 0, %s41
      %s45 = sphi 0, %s44
      %s61 = sphi 0, %s45
      %s65 = sphi 0, %s65
      %s67 = sphi 0, %s65
      %s68 = sphi 0, %s67
      %s82 = sphi 0, %s68
      %s86 = sphi 0, %s86
      %s88 = sphi 0, %s86
      %s89 = sphi 0, %s88
      %s103 = sphi 0, %s89
      %s111 = sphi 0, %s113
      %s114 = sphi 0, %s111
      %s115 = sphi 0, %s114
      %s131 = sphi 0, %s115
      %s139 = sphi 0, %s141
      %s142 = sphi 0, %s139
      %s143 = sphi 0, %s142
      %s159 = sphi 0, %s143
    $region4: #{tpu_custom_call.1} parent=1 // loop_header_branch
      %22 = sbr.rel (%p20) target = $region8
    $region5: #{tpu_custom_call.1} parent=1 // loop_body
      %s24 = ssub.s32 %s19, 1
      %s25 = ssub.s32 %s19, 2
      %s32 = sadd.s32 1, %s27
      %p33 = scmp.ge.s32.totalorder %s32, 4
      %s34 = scalar_select %p33, 0, %s32
      %s35 = sadd.s32 1, %s26
      %s36 = scalar_select %p33, %s35, %s26
      %p37 = scmp.ge.s32.totalorder %s36, 2
      %s38 = scalar_select %p37, 0, %s36
      %s39 = ssub.s32 %s26, %s38
      %p40 = scmp.eq.s32.totalorder %s39, 0
      %s42 = sadd.s32 %s41, 1
      %s43 = scalar_select %p40, %s41, %s42
      %p46 = pneg %p40
      %p47 = scmp.eq.s32.totalorder %s19, 7
      %p48 = por %p46, %p47
      %p49 = scmp.ne.s32.totalorder %s41, %s44
      %p50 = scmp.eq.s32.totalorder %s19, 0
      %p51 = por %p49, %p50
      %p52 = scmp.ne.s32.totalorder %s41, %s44
      %p53 = scmp.eq.s32.totalorder %s24, 7
      %p54 = por %p52, %p53
      %p55 = scmp.ne.s32.totalorder %s44, %s45
      %p56 = scmp.eq.s32.totalorder %s24, 0
      %p57 = por %p55, %p56
      %p58 = scmp.ne.s32.totalorder %s44, %s45
      %p59 = scmp.eq.s32.totalorder %s25, 7
      %p60 = por %p58, %p59
      %p62 = scmp.ne.s32.totalorder %s45, %s61
      %p63 = scmp.eq.s32.totalorder %s25, 0
      %p64 = por %p62, %p63
      %s66 = sadd.s32 %s65, 1
      %p69 = scmp.eq.s32.totalorder %s19, 7
      %p70 = scmp.ne.s32.totalorder %s65, %s67
      %p71 = scmp.eq.s32.totalorder %s19, 0
      %p72 = por %p70, %p71
      %p73 = scmp.ne.s32.totalorder %s65, %s67
      %p74 = scmp.eq.s32.totalorder %s24, 7
      %p75 = por %p73, %p74
      %p76 = scmp.ne.s32.totalorder %s67, %s68
      %p77 = scmp.eq.s32.totalorder %s24, 0
      %p78 = por %p76, %p77
      %p79 = scmp.ne.s32.totalorder %s67, %s68
      %p80 = scmp.eq.s32.totalorder %s25, 7
      %p81 = por %p79, %p80
      %p83 = scmp.ne.s32.totalorder %s68, %s82
      %p84 = scmp.eq.s32.totalorder %s25, 0
      %p85 = por %p83, %p84
      %s87 = sadd.s32 %s86, 1
      %p90 = scmp.eq.s32.totalorder %s19, 7
      %p91 = scmp.ne.s32.totalorder %s86, %s88
      %p92 = scmp.eq.s32.totalorder %s19, 0
      %p93 = por %p91, %p92
      %p94 = scmp.ne.s32.totalorder %s86, %s88
      %p95 = scmp.eq.s32.totalorder %s24, 7
      %p96 = por %p94, %p95
      %p97 = scmp.ne.s32.totalorder %s88, %s89
      %p98 = scmp.eq.s32.totalorder %s24, 0
      %p99 = por %p97, %p98
      %p100 = scmp.ne.s32.totalorder %s88, %s89
      %p101 = scmp.eq.s32.totalorder %s25, 7
      %p102 = por %p100, %p101
      %p104 = scmp.ne.s32.totalorder %s89, %s103
      %p105 = scmp.eq.s32.totalorder %s25, 0
      %p106 = por %p104, %p105
      %s107 = ssub.s32 %s26, %s38
      %s108 = ssub.s32 %s27, %s34
      %s109 = sor.u32 %s107, %s108
      %p110 = scmp.eq.s32.totalorder %s109, 0
      %s112 = sadd.s32 %s111, 1
      %s113 = scalar_select %p110, %s111, %s112
      %p116 = pneg %p110
      %p117 = scmp.eq.s32.totalorder %s19, 7
      %p118 = por %p116, %p117
      %p119 = scmp.ne.s32.totalorder %s111, %s114
      %p120 = scmp.eq.s32.totalorder %s19, 0
      %p121 = por %p119, %p120
      %p122 = scmp.ne.s32.totalorder %s111, %s114
      %p123 = scmp.eq.s32.totalorder %s24, 7
      %p124 = por %p122, %p123
      %p125 = scmp.ne.s32.totalorder %s114, %s115
      %p126 = scmp.eq.s32.totalorder %s24, 0
      %p127 = por %p125, %p126
      %p128 = scmp.ne.s32.totalorder %s114, %s115
      %p129 = scmp.eq.s32.totalorder %s25, 7
      %p130 = por %p128, %p129
      %p132 = scmp.ne.s32.totalorder %s115, %s131
      %p133 = scmp.eq.s32.totalorder %s25, 0
      %p134 = por %p132, %p133
      %s135 = ssub.s32 %s26, %s38
      %s136 = ssub.s32 %s27, %s34
      %s137 = sor.u32 %s135, %s136
      %p138 = scmp.eq.s32.totalorder %s137, 0
      %s140 = sadd.s32 %s139, 1
      %s141 = scalar_select %p138, %s139, %s140
      %p144 = pneg %p138
      %p145 = scmp.eq.s32.totalorder %s19, 7
      %p146 = por %p144, %p145
      %p147 = scmp.ne.s32.totalorder %s139, %s142
      %p148 = scmp.eq.s32.totalorder %s19, 0
      %p149 = por %p147, %p148
      %p150 = scmp.ne.s32.totalorder %s139, %s142
      %p151 = scmp.eq.s32.totalorder %s24, 7
      %p152 = por %p150, %p151
      %p153 = scmp.ne.s32.totalorder %s142, %s143
      %p154 = scmp.eq.s32.totalorder %s24, 0
      %p155 = por %p153, %p154
      %p156 = scmp.ne.s32.totalorder %s142, %s143
      %p157 = scmp.eq.s32.totalorder %s25, 7
      %p158 = por %p156, %p157
      %p160 = scmp.ne.s32.totalorder %s143, %s159
      %p161 = scmp.eq.s32.totalorder %s25, 0
      %p162 = por %p160, %p161
      %p163 = scmp.le.s32.totalorder 1, %s19
      %p164 = scmp.lt.s32.totalorder %s19, 9
      %p165 = pnand %p163, %p164
      %p166 = pneg %p165
      // Predicated region
      $region9: #{tpu_custom_call.1} parent=5 // pred_check
        _
      $region10: #{tpu_custom_call.1} parent=5 // pred_check_branch
        %168 = sbr.rel (%p165) target = $region12
      $region11: #{tpu_custom_call.1} parent=5 // pred_region
        %s169 = ssub.s32 %s19, 1
        // Predicated region
        $region13: #{tpu_custom_call.1} parent=11 // pred_check
          %p170 = pneg %p78
        $region14: #{tpu_custom_call.1} parent=11 // pred_check_branch
          %172 = sbr.rel (%p170) target = $region16
        $region15: #{tpu_custom_call.1} parent=11 // pred_region
          _
        $region16: #{tpu_custom_call.1} parent=11 // pred_fallthru
          _
        // Predicated region
        $region17: #{tpu_custom_call.1} parent=11 // pred_check
          %p173 = pneg %p99
        $region18: #{tpu_custom_call.1} parent=11 // pred_check_branch
          %175 = sbr.rel (%p173) target = $region20
        $region19: #{tpu_custom_call.1} parent=11 // pred_region
          _
        $region20: #{tpu_custom_call.1} parent=11 // pred_fallthru
          _
      $region12: #{tpu_custom_call.1} parent=5 // pred_fallthru
        _
      %p176 = scmp.lt.s32.totalorder %s19, 8
      // Predicated region
      $region21: #{tpu_custom_call.1} parent=5 // pred_check
        %p177 = pneg %p176
      $region22: #{tpu_custom_call.1} parent=5 // pred_check_branch
        %179 = sbr.rel (%p177) target = $region24
      $region23: #{tpu_custom_call.1} parent=5 // pred_region
        // Predicated region
        $region25: #{tpu_custom_call.1} parent=23 // pred_check
          %p180 = pneg %p51
        $region26: #{tpu_custom_call.1} parent=23 // pred_check_branch
          %182 = sbr.rel (%p180) target = $region28
        $region27: #{tpu_custom_call.1} parent=23 // pred_region
          %s183 = sand.u32 %s41, 1
          %s184 = scalar_lea.sflag [#allocation4], %s183
          %s185 = sand.u32 %s41, 1
          %s186 = smul.addr %s185, 64
          %s187 = scalar_lea.vmem [#allocation3], %s186
          %s189 = ssub.s32 1024, 1024
          %190 = vsyncadd %s184, %s189
          %s191 = smul.addr %s26, 8
          %s192 = smul.addr %s191, 128
          %s193 = scalar_lea.hbm %s0, %s192
          %s194 = sshll.u32 %s187, 4
          %s195 = int_to_ptr.vmem [resolvable:$true] %s194
          %200 = dma.hbm_to_vmem [thread:$0]  %s193, 1024, %s195, %s184, 256, 256, 16
        $region28: #{tpu_custom_call.1} parent=23 // pred_fallthru
          _
        // Predicated region
        $region29: #{tpu_custom_call.1} parent=23 // pred_check
          %p201 = pneg %p121
        $region30: #{tpu_custom_call.1} parent=23 // pred_check_branch
          %203 = sbr.rel (%p201) target = $region32
        $region31: #{tpu_custom_call.1} parent=23 // pred_region
          %s204 = sand.u32 %s111, 1
          %s205 = scalar_lea.sflag [#allocation7], %s204
          %s206 = sand.u32 %s111, 1
          %s207 = smul.addr %s206, 32
          %s208 = scalar_lea.vmem [#allocation6], %s207
          %s210 = ssub.s32 512, 512
          %211 = vsyncadd %s205, %s210
          %s212 = smul.addr %s26, 16
          %s213 = sadd.s32 %s27, %s212
          %s214 = smul.addr %s213, 128
          %s215 = scalar_lea.hbm %s3, %s214
          %s216 = sshll.u32 %s208, 4
          %s217 = int_to_ptr.vmem [resolvable:$true] %s216
          %222 = dma.hbm_to_vmem [thread:$0]  %s215, 512, %s217, %s205, 512, 128, 8
        $region32: #{tpu_custom_call.1} parent=23 // pred_fallthru
          _
      $region24: #{tpu_custom_call.1} parent=5 // pred_fallthru
        _
      %p223 = scmp.le.s32.totalorder 1, %s19
      %p224 = scmp.lt.s32.totalorder %s19, 9
      %p225 = pnand %p223, %p224
      %p226 = pneg %p225
      // Predicated region
      $region33: #{tpu_custom_call.1} parent=5 // pred_check
        _
      $region34: #{tpu_custom_call.1} parent=5 // pred_check_branch
        %228 = sbr.rel (%p225) target = $region36
      $region35: #{tpu_custom_call.1} parent=5 // pred_region
        %s229 = ssub.s32 %s19, 1
        %s230 = sand.u32 %s44, 1
        %s231 = scalar_lea.sflag [#allocation4], %s230
        %s232 = sand.u32 %s44, 1
        %s233 = smul.addr %s232, 64
        %s234 = scalar_lea.vmem [#allocation3], %s233
        // Predicated region
        $region37: #{tpu_custom_call.1} parent=35 // pred_check
          %p235 = pneg %p57
        $region38: #{tpu_custom_call.1} parent=35 // pred_check_branch
          %237 = sbr.rel (%p235) target = $region40
        $region39: #{tpu_custom_call.1} parent=35 // pred_region
          %238 = dma.done %s231, 1024
        $region40: #{tpu_custom_call.1} parent=35 // pred_fallthru
          _
        %s239 = sand.u32 %s114, 1
        %s240 = scalar_lea.sflag [#allocation7], %s239
        %s241 = sand.u32 %s114, 1
        %s242 = smul.addr %s241, 32
        %s243 = scalar_lea.vmem [#allocation6], %s242
        // Predicated region
        $region41: #{tpu_custom_call.1} parent=35 // pred_check
          %p244 = pneg %p127
        $region42: #{tpu_custom_call.1} parent=35 // pred_check_branch
          %246 = sbr.rel (%p244) target = $region44
        $region43: #{tpu_custom_call.1} parent=35 // pred_region
          %247 = dma.done %s240, 512
        $region44: #{tpu_custom_call.1} parent=35 // pred_fallthru
          _
        %s248 = sand.u32 %s44, 1
        %s249 = scalar_lea.sflag [#allocation4], %s248
        %s250 = sand.u32 %s44, 1
        %s251 = smul.addr %s250, 64
        %s252 = scalar_lea.vmem [#allocation3], %s251
        %p253 = pneg %p57
        %p254 = pneg %p54
        %p255 = pneg %p78
        %p256 = pneg %p75
        %p257 = pneg %p99
        %p258 = pneg %p96
        %s259 = sand.u32 %s114, 1
        %s260 = scalar_lea.sflag [#allocation7], %s259
        %s261 = sand.u32 %s114, 1
        %s262 = smul.addr %s261, 32
        %s263 = scalar_lea.vmem [#allocation6], %s262
        %p264 = pneg %p127
        %p265 = pneg %p124
        %p266 = pneg %p155
        %p267 = pneg %p152
        %s268 = sand.u32 %s142, 1
        %s269 = scalar_lea.sflag [#allocation5], %s268
        %s270 = sand.u32 %s142, 1
        %s271 = smul.addr %s270, 32
        %s272 = scalar_lea.vmem [#allocation8], %s271
        %p273 = scmp.eq.s32.totalorder %s29, 0
        // Predicated region
        $region45: #{tpu_custom_call.1} parent=35 // pred_check
          %p274 = pneg %p273
        $region46: #{tpu_custom_call.1} parent=35 // pred_check_branch
          %276 = sbr.rel (%p274) target = $region48
        $region47: #{tpu_custom_call.1} parent=35 // pred_region
          %v277 = vld [vmem:[%s234] sm:$0xff]
          %v278 = vld [vmem:[%s234 + $0x8] sm:$0xff]
          %v279 = vld [vmem:[%s234 + $0x10] sm:$0xff]
          %v280 = vld [vmem:[%s234 + $0x18] sm:$0xff]
          %v281 = vld [vmem:[%s234 + $0x20] sm:$0xff]
          %v282 = vld [vmem:[%s234 + $0x28] sm:$0xff]
          %v283 = vld [vmem:[%s234 + $0x30] sm:$0xff]
          %v284 = vld [vmem:[%s234 + $0x38] sm:$0xff]
          %v285 = vadd.f32 %v277, %v278
          %286 = vadd.xlane.f32.xlu0 %v285
          %v287 = vpop.xlane.xlu0 %286
          %v288 = vadd.f32 %v279, %v280
          %289 = vadd.xlane.f32.xlu0 %v288
          %v290 = vpop.xlane.xlu0 %289
          %v291 = vadd.f32 %v281, %v282
          %292 = vadd.xlane.f32.xlu0 %v291
          %v293 = vpop.xlane.xlu0 %292
          %v294 = vadd.f32 %v283, %v284
          %295 = vadd.xlane.f32.xlu0 %v294
          %v296 = vpop.xlane.xlu0 %295
          %v297 = vrcp.pop 256.0
          %v298 = vmul.f32 %v287, %v297
          %v299 = vmul.f32 %v290, %v297
          %v300 = vmul.f32 %v293, %v297
          %v301 = vmul.f32 %v296, %v297
          %v302 = vld [vmem:[%s1] sm:$0xff]
          %vm303 = vcmask 261120
          %v305 = vsel %vm303, %v302, 0
          %307 = vmatprep.subr.mxu0 0.0
          %308 = vmatpush1.msra.mxu0 %v298
          %309 = vmatprep.subr.mxu0 0.0
          %310 = vmatpush1.msra.mxu0 %v299
          %311 = vmatprep.subr.mxu0 0.0
          %312 = vmatpush1.msra.mxu0 %v300
          %313 = vmatprep.subr.mxu0 0.0
          %314 = vmatpush1.msra.mxu0 %v301
          %315 = vmatprep.subr.mxu0 0.0
          %316 = vmatpush1.msra.mxu0 0.0
          %317 = vmatprep.subr.mxu0 0.0
          %318 = vmatpush1.msra.mxu0 0.0
          %319 = vmatprep.subr.mxu0 0.0
          %320 = vmatpush1.msra.mxu0 0.0
          %321 = vmatprep.subr.mxu0 0.0
          %322 = vmatpush1.msra.mxu0 0.0
          %323 = vmatprep.subr.mxu0 0.0
          %324 = vmatpush1.msra.mxu0 0.0
          %325 = vmatprep.subr.mxu0 0.0
          %326 = vmatpush1.msra.mxu0 0.0
          %327 = vmatprep.subr.mxu0 0.0
          %328 = vmatpush1.msra.mxu0 0.0
          %329 = vmatprep.subr.mxu0 0.0
          %330 = vmatpush1.msra.mxu0 0.0
          %331 = vmatprep.subr.mxu0 0.0
          %332 = vmatpush1.msra.mxu0 0.0
          %333 = vmatprep.subr.mxu0 0.0
          %334 = vmatpush1.msra.mxu0 0.0
          %335 = vmatprep.subr.mxu0 0.0
          %336 = vmatpush1.msra.mxu0 0.0
          %337 = vmatprep.subr.mxu0 0.0
          %338 = vmatpush1.msra.mxu0 0.0
          %339 = vmatprep.subr.mxu0 0.0
          %340 = vmatpush1.msra.mxu0 0.0
          %341 = vmatprep.subr.mxu0 0.0
          %342 = vmatpush1.msra.mxu0 0.0
          %343 = vmatprep.subr.mxu0 0.0
          %344 = vmatpush1.msra.mxu0 0.0
          %345 = vmatprep.subr.mxu0 0.0
          %346 = vmatpush1.msra.mxu0 0.0
          %347 = vmatprep.subr.mxu0 0.0
          %348 = vmatpush1.msra.mxu0 0.0
          %349 = vmatprep.subr.mxu0 0.0
          %350 = vmatpush1.msra.mxu0 0.0
          %351 = vmatprep.subr.mxu0 0.0
          %352 = vmatpush1.msra.mxu0 0.0
          %353 = vmatprep.subr.mxu0 0.0
          %354 = vmatpush1.msra.mxu0 0.0
          %355 = vmatprep.subr.mxu0 0.0
          %356 = vmatpush1.msra.mxu0 0.0
          %357 = vmatprep.subr.mxu0 0.0
          %358 = vmatpush1.msra.mxu0 0.0
          %359 = vmatprep.subr.mxu0 0.0
          %360 = vmatpush1.msra.mxu0 0.0
          %361 = vmatprep.subr.mxu0 0.0
          %362 = vmatpush1.msra.mxu0 0.0
          %363 = vmatprep.subr.mxu0 0.0
          %364 = vmatpush1.msra.mxu0 0.0
          %365 = vmatprep.subr.mxu0 0.0
          %366 = vmatpush1.msra.mxu0 0.0
          %367 = vmatprep.subr.mxu0 0.0
          %368 = vmatpush1.msra.mxu0 0.0
          %369 = vmatprep.subr.mxu0 0.0
          %370 = vmatpush1.msra.mxu0 0.0
          %371 = vmatprep.mubr.f32.mxu0 0.0
          %372 = vmatmul.mubr.f32.gmra.mrb[0].mxu0 %v305
          %v373 = vpop.f32.mrb[0].mxu0
          %v374 = vadd.f32 0.0, %v373
          %v375 = vpop.f32.mrb[0].mxu0
          %376 = vdwg.mxu0
          %v377 = vmax.f32 %v374, 0.0
          %v378 = vld [vmem:[%s2] sm:$0xff]
          %v379 = vld [vmem:[%s2 + $0x8] sm:$0xff]
          %v380 = vld [vmem:[%s2 + $0x10] sm:$0xff]
          %v381 = vld [vmem:[%s2 + $0x18] sm:$0xff]
          %vm382 = vcmask 64512
          %v384 = vsel %vm382, %v378, 0
          %v387 = vsel %vm382, %v379, 0
          %v390 = vsel %vm382, %v380, 0
          %v393 = vsel %vm382, %v381, 0
          %395 = vmatprep.subr.mxu0 0.0
          %396 = vmatpush1.msra.mxu0 %v377
          %397 = vmatprep.subr.mxu0 0.0
          %398 = vmatpush1.msra.mxu0 0.0
          %399 = vmatprep.subr.mxu0 0.0
          %400 = vmatpush1.msra.mxu0 0.0
          %401 = vmatprep.subr.mxu0 0.0
          %402 = vmatpush1.msra.mxu0 0.0
          %403 = vmatprep.subr.mxu0 0.0
          %404 = vmatpush1.msra.mxu0 0.0
          %405 = vmatprep.subr.mxu0 0.0
          %406 = vmatpush1.msra.mxu0 0.0
          %407 = vmatprep.subr.mxu0 0.0
          %408 = vmatpush1.msra.mxu0 0.0
          %409 = vmatprep.subr.mxu0 0.0
          %410 = vmatpush1.msra.mxu0 0.0
          %411 = vmatprep.subr.mxu0 0.0
          %412 = vmatpush1.msra.mxu0 0.0
          %413 = vmatprep.subr.mxu0 0.0
          %414 = vmatpush1.msra.mxu0 0.0
          %415 = vmatprep.subr.mxu0 0.0
          %416 = vmatpush1.msra.mxu0 0.0
          %417 = vmatprep.subr.mxu0 0.0
          %418 = vmatpush1.msra.mxu0 0.0
          %419 = vmatprep.subr.mxu0 0.0
          %420 = vmatpush1.msra.mxu0 0.0
          %421 = vmatprep.subr.mxu0 0.0
          %422 = vmatpush1.msra.mxu0 0.0
          %423 = vmatprep.subr.mxu0 0.0
          %424 = vmatpush1.msra.mxu0 0.0
          %425 = vmatprep.subr.mxu0 0.0
          %426 = vmatpush1.msra.mxu0 0.0
          %427 = vmatprep.subr.mxu0 0.0
          %428 = vmatpush1.msra.mxu0 0.0
          %429 = vmatprep.subr.mxu0 0.0
          %430 = vmatpush1.msra.mxu0 0.0
          %431 = vmatprep.subr.mxu0 0.0
          %432 = vmatpush1.msra.mxu0 0.0
          %433 = vmatprep.subr.mxu0 0.0
          %434 = vmatpush1.msra.mxu0 0.0
          %435 = vmatprep.subr.mxu0 0.0
          %436 = vmatpush1.msra.mxu0 0.0
          %437 = vmatprep.subr.mxu0 0.0
          %438 = vmatpush1.msra.mxu0 0.0
          %439 = vmatprep.subr.mxu0 0.0
          %440 = vmatpush1.msra.mxu0 0.0
          %441 = vmatprep.subr.mxu0 0.0
          %442 = vmatpush1.msra.mxu0 0.0
          %443 = vmatprep.subr.mxu0 0.0
          %444 = vmatpush1.msra.mxu0 0.0
          %445 = vmatprep.subr.mxu0 0.0
          %446 = vmatpush1.msra.mxu0 0.0
          %447 = vmatprep.subr.mxu0 0.0
          %448 = vmatpush1.msra.mxu0 0.0
          %449 = vmatprep.subr.mxu0 0.0
          %450 = vmatpush1.msra.mxu0 0.0
          %451 = vmatprep.subr.mxu0 0.0
          %452 = vmatpush1.msra.mxu0 0.0
          %453 = vmatprep.subr.mxu0 0.0
          %454 = vmatpush1.msra.mxu0 0.0
          %455 = vmatprep.subr.mxu0 0.0
          %456 = vmatpush1.msra.mxu0 0.0
          %457 = vmatprep.subr.mxu0 0.0
          %458 = vmatpush1.msra.mxu0 0.0
          %459 = vmatprep.mubr.f32.mxu0 0.0
          %460 = vmatmul.mubr.f32.gmra.mrb[0].mxu0 %v384
          %v461 = vpop.f32.mrb[0].mxu0
          %v462 = vadd.f32 0.0, %v461
          %v463 = vpop.f32.mrb[0].mxu0
          %464 = vmatprep.mubr.f32.mxu0 0.0
          %465 = vmatmul.mubr.f32.gmra.mrb[0].mxu0 %v387
          %v466 = vpop.f32.mrb[0].mxu0
          %v467 = vadd.f32 0.0, %v466
          %v468 = vpop.f32.mrb[0].mxu0
          %469 = vmatprep.mubr.f32.mxu0 0.0
          %470 = vmatmul.mubr.f32.gmra.mrb[0].mxu0 %v390
          %v471 = vpop.f32.mrb[0].mxu0
          %v472 = vadd.f32 0.0, %v471
          %v473 = vpop.f32.mrb[0].mxu0
          %474 = vmatprep.mubr.f32.mxu0 0.0
          %475 = vmatmul.mubr.f32.gmra.mrb[0].mxu0 %v393
          %v476 = vpop.f32.mrb[0].mxu0
          %v477 = vadd.f32 0.0, %v476
          %v478 = vpop.f32.mrb[0].mxu0
          %479 = vdwg.mxu0
          %v480 = vxor.u32 %v462, 2147483648
          %v481 = vxor.u32 %v467, 2147483648
          %v482 = vxor.u32 %v472, 2147483648
          %v483 = vxor.u32 %v477, 2147483648
          %v484 = vmul.f32 %v480, 1.442695
          %v485 = vpow.pop %v484
          %v486 = vmul.f32 %v481, 1.442695
          %v487 = vpow.pop %v486
          %v488 = vmul.f32 %v482, 1.442695
          %v489 = vpow.pop %v488
          %v490 = vmul.f32 %v483, 1.442695
          %v491 = vpow.pop %v490
          %v492 = vadd.f32 %v485, 1.0
          %v493 = vadd.f32 %v487, 1.0
          %v494 = vadd.f32 %v489, 1.0
          %v495 = vadd.f32 %v491, 1.0
          %v496 = vrcp.pop %v492
          %v497 = vmul.f32 1.0, %v496
          %v498 = vrcp.pop %v493
          %v499 = vmul.f32 1.0, %v498
          %v500 = vrcp.pop %v494
          %v501 = vmul.f32 1.0, %v500
          %v502 = vrcp.pop %v495
          %v503 = vmul.f32 1.0, %v502
          %vm504 = vcmask 7168
          %505 = vst.msk [vmem:[#allocation2] sm:$0xff] %vm504, %v497
          %506 = vst.msk [vmem:[#allocation2 + $0x8] sm:$0xff] %vm504, %v499
          %507 = vst.msk [vmem:[#allocation2 + $0x10] sm:$0xff] %vm504, %v501
          %508 = vst.msk [vmem:[#allocation2 + $0x18] sm:$0xff] %vm504, %v503
        $region48: #{tpu_custom_call.1} parent=35 // pred_fallthru
          _
        %v509 = vld [vmem:[%s243] sm:$0xff]
        %v510 = vld [vmem:[%s243 + $0x8] sm:$0xff]
        %v511 = vld [vmem:[%s243 + $0x10] sm:$0xff]
        %v512 = vld [vmem:[%s243 + $0x18] sm:$0xff]
        %v513 = vld [vmem:[#allocation2] sm:$0xff]
        %v514 = vld [vmem:[#allocation2 + $0x8] sm:$0xff]
        %v515 = vld [vmem:[#allocation2 + $0x10] sm:$0xff]
        %v516 = vld [vmem:[#allocation2 + $0x18] sm:$0xff]
        %518 = vset.pattern.permute.xlu0 0
        %519 = vperm.xlu0 %518, %v513
        %v520 = vpop.permute.xlu0 %519
        %523 = vset.pattern.permute.xlu0 0
        %524 = vperm.xlu0 %523, %v514
        %v525 = vpop.permute.xlu0 %524
        %528 = vset.pattern.permute.xlu0 0
        %529 = vperm.xlu0 %528, %v515
        %v530 = vpop.permute.xlu0 %529
        %533 = vset.pattern.permute.xlu0 0
        %534 = vperm.xlu0 %533, %v516
        %v535 = vpop.permute.xlu0 %534
        %v537 = vmul.f32 %v509, %v520
        %v538 = vmul.f32 %v510, %v525
        %v539 = vmul.f32 %v511, %v530
        %v540 = vmul.f32 %v512, %v535
        %541 = vst [vmem:[%s272] sm:$0xff] %v537
        %542 = vst [vmem:[%s272 + $0x8] sm:$0xff] %v538
        %543 = vst [vmem:[%s272 + $0x10] sm:$0xff] %v539
        %544 = vst [vmem:[%s272 + $0x18] sm:$0xff] %v540
        %s545 = sand.u32 %s142, 1
        %s546 = scalar_lea.sflag [#allocation5], %s545
        %s547 = sand.u32 %s142, 1
        %s548 = smul.addr %s547, 32
        %s549 = scalar_lea.vmem [#allocation8], %s548
        // Predicated region
        $region49: #{tpu_custom_call.1} parent=35 // pred_check
          %p550 = pneg %p152
        $region50: #{tpu_custom_call.1} parent=35 // pred_check_branch
          %552 = sbr.rel (%p550) target = $region52
        $region51: #{tpu_custom_call.1} parent=35 // pred_region
          %s554 = ssub.s32 512, 512
          %555 = vsyncadd %s546, %s554
          %s556 = smul.addr %s28, 16
          %s557 = sadd.s32 %s29, %s556
          %s558 = smul.addr %s557, 128
          %s559 = scalar_lea.hbm %s4, %s558
          %s560 = sshll.u32 %s549, 4
          %s561 = int_to_ptr.vmem [resolvable:$true] %s560
          %566 = dma.vmem_to_hbm [thread:$0]  %s561, 512, %s559, %s546, 128, 512, 8
        $region52: #{tpu_custom_call.1} parent=35 // pred_fallthru
          _
      $region36: #{tpu_custom_call.1} parent=5 // pred_fallthru
        _
      %p567 = scmp.le.s32.totalorder 2, %s19
      // Predicated region
      $region53: #{tpu_custom_call.1} parent=5 // pred_check
        %p568 = pneg %p567
      $region54: #{tpu_custom_call.1} parent=5 // pred_check_branch
        %570 = sbr.rel (%p568) target = $region56
      $region55: #{tpu_custom_call.1} parent=5 // pred_region
        %s571 = ssub.s32 %s19, 2
        // Predicated region
        $region57: #{tpu_custom_call.1} parent=55 // pred_check
          %p572 = pneg %p158
        $region58: #{tpu_custom_call.1} parent=55 // pred_check_branch
          %574 = sbr.rel (%p572) target = $region60
        $region59: #{tpu_custom_call.1} parent=55 // pred_region
          %s575 = sand.u32 %s143, 1
          %s576 = scalar_lea.sflag [#allocation5], %s575
          %s577 = sand.u32 %s143, 1
          %s578 = smul.addr %s577, 32
          %s579 = scalar_lea.vmem [#allocation8], %s578
          %580 = dma.done %s576, 512
        $region60: #{tpu_custom_call.1} parent=55 // pred_fallthru
          _
      $region56: #{tpu_custom_call.1} parent=5 // pred_fallthru
        _
    $region6: #{tpu_custom_call.1} parent=1 // loop_footer
      %s23 = sadd.s32 1, %s19
    $region7: #{tpu_custom_call.1} parent=1 // loop_footer_branch
      %18 = sbr.rel target = $region3
    $region8: #{tpu_custom_call.1} parent=1 // loop_exit
      _
    %581 = vsyncpa [#allocation4], 1
    %s582 = scalar_lea.sflag [#allocation4], 1
    %583 = vsyncpa %s582, 1
    %584 = vsyncpa [#allocation7], 1
    %s585 = scalar_lea.sflag [#allocation7], 1
    %586 = vsyncpa %s585, 1
    %587 = vsyncpa [#allocation5], 1
    %s588 = scalar_lea.sflag [#allocation5], 1
    %589 = vsyncpa %s588, 1

</llo_original>
